<compile_context>
chip_gen: v6e
topology: v6e:2x2x1
jax: 0.10.0
libtpu: 0.0.40
codegen_flags: <defaults>
</compile_context>

<pallas_src>
import functools
import math

import numpy as np

import jax
import jax.numpy as jnp
from jax.experimental import pallas as pl
from jax.experimental.pallas import tpu as pltpu

MAX_LEN = 5000  # matches the PyTorch module default; only an upper bound here.


# ----------------------------------------------------------------------------
# Kernel: pure elementwise (broadcast) add of a resident PE tile onto x.
# ----------------------------------------------------------------------------
def _pe_add_kernel(x_ref, pe_ref, o_ref):
    # x_ref/o_ref: (tb, tr, D) tile of the input/output.
    # pe_ref:      (tr, D) tile of the batch-invariant PE table (x.dtype).
    x = x_ref[...].astype(jnp.float32)
    pe = pe_ref[...].astype(jnp.float32)
    o_ref[...] = (x + pe).astype(o_ref.dtype)  # (tr,D) broadcasts over tb


# ----------------------------------------------------------------------------
# PE table: computed once per (S, D, dtype) on the host (register_buffer-like).
# ----------------------------------------------------------------------------
@functools.lru_cache(maxsize=16)
def _pe_table(seq_len, d_model, dtype_str):
    pos = np.arange(seq_len, dtype=np.float32)[:, None]            # (S, 1)
    dim = np.arange(d_model)                                       # (D,)
    two_i = (2 * (dim // 2)).astype(np.float32)
    div_term = np.exp(two_i * (-math.log(10000.0) / d_model))      # (D,)
    angle = pos * div_term[None, :]                                 # (S, D)
    pe = np.where((dim % 2 == 0)[None, :], np.sin(angle), np.cos(angle))
    return jnp.asarray(pe.astype(np.float32), dtype=jnp.dtype(dtype_str))


# ----------------------------------------------------------------------------
# Tile sizing (shape-only, runs at trace time).
# ----------------------------------------------------------------------------
def _choose_tiles(B, S, D, x_itemsize):
    # ~4 MiB x-block: 2*(x + out) + pe double-buffered stays well under the
    # 40 MiB vmem limit we request below (safe on v5e/v6e/v7x).
    target = 4 * 1024 * 1024
    bytes_per_row = D * x_itemsize

    if S * bytes_per_row <= target:
        tr = S
    else:
        tr = max(8, (target // bytes_per_row) // 8 * 8)
        tr = min(tr, S)

    # Fold multiple batch elements into one block when a (tr, D) slab is small.
    tb = 1
    slab = tr * bytes_per_row
    if tr == S and slab < target:
        tb = int(min(B, max(1, target // max(1, slab))))

    # v7x megacore: make sure there are >= 2 parallel blocks when possible.
    n_r = pl.cdiv(S, tr)
    n_b = pl.cdiv(B, tb)
    if n_r * n_b < 2:
        if B >= 2:
            tb = (B + 1) // 2
        elif S >= 16:
            tr = max(8, (S // 2) // 8 * 8)

    return tb, tr


# ----------------------------------------------------------------------------
# Jitted Pallas wrapper (pe is a runtime argument, not a baked constant).
# ----------------------------------------------------------------------------
@jax.jit
def _pe_add(x, pe):
    B, S, D = x.shape
    tb, tr = _choose_tiles(B, S, D, jnp.dtype(x.dtype).itemsize)

    grid = (pl.cdiv(S, tr), pl.cdiv(B, tb))  # batch innermost -> PE tile stays resident

    return pl.pallas_call(
        _pe_add_kernel,
        out_shape=jax.ShapeDtypeStruct((B, S, D), x.dtype),
        grid=grid,
        in_specs=[
            pl.BlockSpec((tb, tr, D), lambda r, b: (b, r, 0)),
            # PE block index constant across the batch axis -> not re-DMA'd
            # between consecutive batch steps.
            pl.BlockSpec((tr, D), lambda r, b: (r, 0)),
        ],
        out_specs=pl.BlockSpec((tb, tr, D), lambda r, b: (b, r, 0)),
        compiler_params=pltpu.CompilerParams(
            dimension_semantics=("parallel", "parallel"),
            vmem_limit_bytes=40 * 1024 * 1024,
        ),
    )(x, pe)


def sinusoidal_positional_encoding(x):
    """Adds sinusoidal positional encoding to x of shape (B, S, D)."""
    B, S, D = x.shape
    assert S <= MAX_LEN, "sequence length exceeds max_len"
    pe = _pe_table(S, D, str(jnp.dtype(x.dtype)))  # cached, device-resident
    return _pe_add(x, pe)


# ----------------------------------------------------------------------------
# Plain-JAX reference (mirrors the PyTorch module) for verification.
# ----------------------------------------------------------------------------
def _reference(x):
    B, S, D = x.shape
    position = jnp.arange(MAX_LEN, dtype=jnp.float32)[:, None]
    div_term = jnp.exp(jnp.arange(0, D, 2, dtype=jnp.float32)
                       * (-math.log(10000.0) / D))
    pe = jnp.zeros((MAX_LEN, D), dtype=jnp.float32)
    pe = pe.at[:, 0::2].set(jnp.sin(position * div_term))
    pe = pe.at[:, 1::2].set(jnp.cos(position * div_term))
    return x.astype(jnp.float32) + pe[None, :S, :]


if __name__ == "__main__":
    key = jax.random.PRNGKey(0)

    # Config 1: small shape consistent with the module (batch=2, seq=8, hidden=32).
    B, S, D = 2, 8, 32
    x = jax.random.normal(key, (B, S, D), dtype=jnp.float32)
    out = jax.block_until_ready(sinusoidal_positional_encoding(x))
    ref = _reference(x)
    assert out.shape == ref.shape
    assert jnp.allclose(out, ref, atol=1e-5, rtol=1e-5), "mismatch (config 1)"

    # Config 2: lane-aligned d_model.
    x2 = jax.random.normal(jax.random.PRNGKey(0), (2, 16, 128), dtype=jnp.float32)
    out2 = jax.block_until_ready(sinusoidal_positional_encoding(x2))
    assert jnp.allclose(out2, _reference(x2), atol=1e-5, rtol=1e-5), "mismatch (config 2)"

    # Config 3: exercises batch tiling + megacore split (grid has >=2 blocks).
    x3 = jax.random.normal(jax.random.PRNGKey(0), (4, 128, 256), dtype=jnp.float32)
    out3 = jax.block_until_ready(sinusoidal_positional_encoding(x3))
    assert jnp.allclose(out3, _reference(x3), atol=1e-5, rtol=1e-5), "mismatch (config 3)"

    # Config 4: bf16 input (PE DMA'd as bf16, add in f32, output bf16).
    x4 = jax.random.normal(jax.random.PRNGKey(0), (2, 8, 32), dtype=jnp.bfloat16)
    out4 = jax.block_until_ready(sinusoidal_positional_encoding(x4))
    assert jnp.allclose(out4.astype(jnp.float32), _reference(x4), atol=0.06, rtol=0.02), \
        "mismatch (config 4)"

    print("KERNEL_OK")
</pallas_src>

<mosaic_0001>
module attributes {stable_mosaic.version = 11 : i64} {
  func.func @_pe_add_kernel(%arg0: i32, %arg1: i32, %arg2: memref<1x8x32xf32, #tpu.memory_space<vmem>>, %arg3: memref<8x32xf32, #tpu.memory_space<vmem>>, %arg4: memref<1x8x32xf32, #tpu.memory_space<vmem>>) attributes {dimension_semantics = [#tpu.dimension_semantics<parallel>, #tpu.dimension_semantics<parallel>], iteration_bounds = array<i64: 1, 2>, scalar_prefetch = 0 : i64, scratch_operands = 0 : i64, tpu.core_type = #tpu.core_type<tc>, window_params = [{transform_indices = @transform_0, window_bounds = array<i64: 1, 8, 32>}, {transform_indices = @transform_1, window_bounds = array<i64: 8, 32>}, {transform_indices = @transform_2, window_bounds = array<i64: 1, 8, 32>}]} {
    %c0 = arith.constant 0 : index
    %c0_0 = arith.constant 0 : index
    %c0_1 = arith.constant 0 : index
    %0 = vector.load %arg2[%c0, %c0_0, %c0_1] : memref<1x8x32xf32, #tpu.memory_space<vmem>>, vector<1x8x32xf32>
    %c0_2 = arith.constant 0 : index
    %c0_3 = arith.constant 0 : index
    %1 = vector.load %arg3[%c0_2, %c0_3] : memref<8x32xf32, #tpu.memory_space<vmem>>, vector<8x32xf32>
    %2 = vector.shape_cast %1 : vector<8x32xf32> to vector<1x8x32xf32>
    %3 = arith.addf %0, %2 : vector<1x8x32xf32>
    %c0_4 = arith.constant 0 : index
    %c0_5 = arith.constant 0 : index
    %c0_6 = arith.constant 0 : index
    %4 = vector.load %arg4[%c0_4, %c0_5, %c0_6] : memref<1x8x32xf32, #tpu.memory_space<vmem>>, vector<1x8x32xf32>
    tpu.vector_store %arg4[%c0_4, %c0_5, %c0_6], %3 {strides = array<i32>} : memref<1x8x32xf32, #tpu.memory_space<vmem>>, vector<1x8x32xf32>,
    return
  }
  func.func @transform_0(%arg0: i32, %arg1: i32) -> (i32, i32, i32) {
    %c0_i32 = arith.constant 0 : i32
    %c0_i32_0 = arith.constant 0 : i32
    return %arg1, %arg0, %c0_i32 : i32, i32, i32
  }
  func.func @transform_1(%arg0: i32, %arg1: i32) -> (i32, i32) {
    %c0_i32 = arith.constant 0 : i32
    %c0_i32_0 = arith.constant 0 : i32
    return %arg0, %c0_i32 : i32, i32
  }
  func.func @transform_2(%arg0: i32, %arg1: i32) -> (i32, i32, i32) {
    %c0_i32 = arith.constant 0 : i32
    %c0_i32_0 = arith.constant 0 : i32
    return %arg1, %arg0, %c0_i32 : i32, i32, i32
  }
}

</mosaic_0001>

<llo_original>
// kernel: _pe_add.1
$region0: #{_pe_add.1}
  #allocation0 [shape = 'u32[]', space=smem, size = 0x4, offset = 0x4, fixed_abs, tag = 'smem constant byte address 0x4 - core index']
  #allocation1 [shape = 'u32[144,128]{1,0:T(1,128)}', space=vmem, size = 0x12000, scoped, tag = 'internal scratch']
  %s0 = inlined_call_operand.hbm [shape: f32[2,8,32], index: 0, kind: input, shape index: {}]
  %s1 = inlined_call_operand.hbm [shape: f32[8,32], index: 1, kind: input, shape index: {}]
  %s2 = inlined_call_operand.hbm [shape: f32[2,8,32], index: 2, kind: output, shape index: {}]
  %s3 = sld [smem:[#allocation0]]
  $region49: #{_pe_add.1} parent=0
    _
  %s5 = ssub.s32 1, %s3
  %s6 = scalar_select 0, %s5, %s3
  $region1: #{_pe_add.1} parent=0
    #allocation2 [shape = 'u8[8192]{0}', space=vmem, size = 0x2000, scoped, tag = 'input window, operand 0']
    #allocation3 [shape = 's32[2]{0}', space=sflag, size = 0x8, scoped, tag = 'scoped memory for _pe_add.1']
    #allocation4 [shape = 's32[2]{0}', space=sflag, size = 0x8, scoped, tag = 'scoped memory for _pe_add.1']
    #allocation5 [shape = 'u8[4096]{0}', space=vmem, size = 0x1000, scoped, tag = 'input window, operand 1, single buffered']
    #allocation6 [shape = 's32[1]{0}', space=sflag, size = 0x4, scoped, tag = 'scoped memory for _pe_add.1']
    #allocation7 [shape = 'u8[8192]{0}', space=vmem, size = 0x2000, scoped, tag = 'output window, operand 0']
    %7 = vsyncpa [#allocation3], 0
    %s8 = scalar_lea.sflag [#allocation3], 1
    %9 = vsyncpa %s8, 0
    %10 = vsyncpa [#allocation6], 0
    %11 = vsyncpa [#allocation4], 0
    %s12 = scalar_lea.sflag [#allocation4], 1
    %13 = vsyncpa %s12, 0
    loop: start=0, step=1, limit=4
    $region2: #{_pe_add.1} parent=1 // loop_pre_header
      _
    $region3: #{_pe_add.1} parent=1 // loop_header
      %s15 = sphi 0, %s19
      %p16 = scmp.ge.s32.totalorder %s15, 4
      %s22 = sphi 0, %s34
      %s23 = sphi 0, %s30
      %s24 = sphi 0, %s22
      %s25 = sphi 0, %s23
      %s26 = sphi 0, %s24
      %s27 = sphi 0, %s25
      %s39 = sphi 0, %s41
      %s42 = sphi 0, %s39
      %s43 = sphi 0, %s42
      %s59 = sphi 0, %s43
      %s65 = sphi 0, %s67
      %s68 = sphi 0, %s65
      %s69 = sphi 0, %s68
      %s85 = sphi 0, %s69
      %s93 = sphi 0, %s95
      %s96 = sphi 0, %s93
      %s97 = sphi 0, %s96
      %s113 = sphi 0, %s97
    $region4: #{_pe_add.1} parent=1 // loop_header_branch
      %18 = sbr.rel (%p16) target = $region8
    $region5: #{_pe_add.1} parent=1 // loop_body
      %s20 = ssub.s32 %s15, 1
      %s21 = ssub.s32 %s15, 2
      %s28 = sadd.s32 1, %s23
      %p29 = scmp.ge.s32.totalorder %s28, 2
      %s30 = scalar_select %p29, 0, %s28
      %s31 = sadd.s32 1, %s22
      %s32 = scalar_select %p29, %s31, %s22
      %p33 = scmp.ge.s32.totalorder %s32, 1
      %s34 = scalar_select %p33, 0, %s32
      %s35 = ssub.s32 %s23, %s30
      %s36 = ssub.s32 %s22, %s34
      %s37 = sor.u32 %s35, %s36
      %p38 = scmp.eq.s32.totalorder %s37, 0
      %s40 = sadd.s32 %s39, 1
      %s41 = scalar_select %p38, %s39, %s40
      %p44 = pneg %p38
      %p45 = scmp.eq.s32.totalorder %s15, 1
      %p46 = por %p44, %p45
      %p47 = scmp.ne.s32.totalorder %s39, %s42
      %p48 = scmp.eq.s32.totalorder %s15, 0
      %p49 = por %p47, %p48
      %p50 = scmp.ne.s32.totalorder %s39, %s42
      %p51 = scmp.eq.s32.totalorder %s20, 1
      %p52 = por %p50, %p51
      %p53 = scmp.ne.s32.totalorder %s42, %s43
      %p54 = scmp.eq.s32.totalorder %s20, 0
      %p55 = por %p53, %p54
      %p56 = scmp.ne.s32.totalorder %s42, %s43
      %p57 = scmp.eq.s32.totalorder %s21, 1
      %p58 = por %p56, %p57
      %p60 = scmp.ne.s32.totalorder %s43, %s59
      %p61 = scmp.eq.s32.totalorder %s21, 0
      %p62 = por %p60, %p61
      %s63 = ssub.s32 %s22, %s34
      %p64 = scmp.eq.s32.totalorder %s63, 0
      %s66 = sadd.s32 %s65, 1
      %s67 = scalar_select %p64, %s65, %s66
      %p70 = pneg %p64
      %p71 = scmp.eq.s32.totalorder %s15, 1
      %p72 = por %p70, %p71
      %p73 = scmp.ne.s32.totalorder %s65, %s68
      %p74 = scmp.eq.s32.totalorder %s15, 0
      %p75 = por %p73, %p74
      %p76 = scmp.ne.s32.totalorder %s65, %s68
      %p77 = scmp.eq.s32.totalorder %s20, 1
      %p78 = por %p76, %p77
      %p79 = scmp.ne.s32.totalorder %s68, %s69
      %p80 = scmp.eq.s32.totalorder %s20, 0
      %p81 = por %p79, %p80
      %p82 = scmp.ne.s32.totalorder %s68, %s69
      %p83 = scmp.eq.s32.totalorder %s21, 1
      %p84 = por %p82, %p83
      %p86 = scmp.ne.s32.totalorder %s69, %s85
      %p87 = scmp.eq.s32.totalorder %s21, 0
      %p88 = por %p86, %p87
      %s89 = ssub.s32 %s23, %s30
      %s90 = ssub.s32 %s22, %s34
      %s91 = sor.u32 %s89, %s90
      %p92 = scmp.eq.s32.totalorder %s91, 0
      %s94 = sadd.s32 %s93, 1
      %s95 = scalar_select %p92, %s93, %s94
      %p98 = pneg %p92
      %p99 = scmp.eq.s32.totalorder %s15, 1
      %p100 = por %p98, %p99
      %p101 = scmp.ne.s32.totalorder %s93, %s96
      %p102 = scmp.eq.s32.totalorder %s15, 0
      %p103 = por %p101, %p102
      %p104 = scmp.ne.s32.totalorder %s93, %s96
      %p105 = scmp.eq.s32.totalorder %s20, 1
      %p106 = por %p104, %p105
      %p107 = scmp.ne.s32.totalorder %s96, %s97
      %p108 = scmp.eq.s32.totalorder %s20, 0
      %p109 = por %p107, %p108
      %p110 = scmp.ne.s32.totalorder %s96, %s97
      %p111 = scmp.eq.s32.totalorder %s21, 1
      %p112 = por %p110, %p111
      %p114 = scmp.ne.s32.totalorder %s97, %s113
      %p115 = scmp.eq.s32.totalorder %s21, 0
      %p116 = por %p114, %p115
      %p117 = scmp.le.s32.totalorder 1, %s15
      %p118 = scmp.lt.s32.totalorder %s15, 3
      %p119 = pnand %p117, %p118
      %p120 = pneg %p119
      // Predicated region
      $region9: #{_pe_add.1} parent=5 // pred_check
        _
      $region10: #{_pe_add.1} parent=5 // pred_check_branch
        %122 = sbr.rel (%p119) target = $region12
      $region11: #{_pe_add.1} parent=5 // pred_region
        %s123 = ssub.s32 %s15, 1
        // Predicated region
        $region13: #{_pe_add.1} parent=11 // pred_check
          %p124 = pneg %p81
        $region14: #{_pe_add.1} parent=11 // pred_check_branch
          %126 = sbr.rel (%p124) target = $region16
        $region15: #{_pe_add.1} parent=11 // pred_region
          %s128 = ssub.s32 128, 128
          %129 = vsyncadd [#allocation6], %s128
          %s130 = smul.addr %s24, 128
          %s131 = scalar_lea.hbm %s1, %s130
          %s133 = sshll.u32 [#allocation5], 4
          %s134 = int_to_ptr.vmem [resolvable:$true] %s133
          %136 = dma.hbm_to_vmem [thread:$0]  %s131, 128, %s134, [#allocation6]
        $region16: #{_pe_add.1} parent=11 // pred_fallthru
          _
      $region12: #{_pe_add.1} parent=5 // pred_fallthru
        _
      %p137 = scmp.lt.s32.totalorder %s15, 2
      // Predicated region
      $region17: #{_pe_add.1} parent=5 // pred_check
        %p138 = pneg %p137
      $region18: #{_pe_add.1} parent=5 // pred_check_branch
        %140 = sbr.rel (%p138) target = $region20
      $region19: #{_pe_add.1} parent=5 // pred_region
        // Predicated region
        $region21: #{_pe_add.1} parent=19 // pred_check
          %p141 = pneg %p49
        $region22: #{_pe_add.1} parent=19 // pred_check_branch
          %143 = sbr.rel (%p141) target = $region24
        $region23: #{_pe_add.1} parent=19 // pred_region
          %s144 = sand.u32 %s39, 1
          %s145 = scalar_lea.sflag [#allocation3], %s144
          %s146 = sand.u32 %s39, 1
          %s147 = smul.addr %s146, 8
          %s148 = scalar_lea.vmem [#allocation2], %s147
          %s150 = ssub.s32 128, 128
          %151 = vsyncadd %s145, %s150
          %s152 = sadd.s32 %s22, %s23
          %s153 = smul.addr %s152, 128
          %s154 = scalar_lea.hbm %s0, %s153
          %s156 = sshll.u32 %s148, 4
          %s157 = int_to_ptr.vmem [resolvable:$true] %s156
          %159 = dma.hbm_to_vmem [thread:$0]  %s154, 128, %s157, %s145
        $region24: #{_pe_add.1} parent=19 // pred_fallthru
          _
      $region20: #{_pe_add.1} parent=5 // pred_fallthru
        _
      %p160 = scmp.le.s32.totalorder 1, %s15
      %p161 = scmp.lt.s32.totalorder %s15, 3
      %p162 = pnand %p160, %p161
      %p163 = pneg %p162
      // Predicated region
      $region25: #{_pe_add.1} parent=5 // pred_check
        _
      $region26: #{_pe_add.1} parent=5 // pred_check_branch
        %165 = sbr.rel (%p162) target = $region28
      $region27: #{_pe_add.1} parent=5 // pred_region
        %s166 = ssub.s32 %s15, 1
        %s167 = sand.u32 %s42, 1
        %s168 = scalar_lea.sflag [#allocation3], %s167
        %s169 = sand.u32 %s42, 1
        %s170 = smul.addr %s169, 8
        %s171 = scalar_lea.vmem [#allocation2], %s170
        // Predicated region
        $region29: #{_pe_add.1} parent=27 // pred_check
          %p172 = pneg %p55
        $region30: #{_pe_add.1} parent=27 // pred_check_branch
          %174 = sbr.rel (%p172) target = $region32
        $region31: #{_pe_add.1} parent=27 // pred_region
          %175 = dma.done %s168, 128
        $region32: #{_pe_add.1} parent=27 // pred_fallthru
          _
        // Predicated region
        $region33: #{_pe_add.1} parent=27 // pred_check
          %p176 = pneg %p81
        $region34: #{_pe_add.1} parent=27 // pred_check_branch
          %178 = sbr.rel (%p176) target = $region36
        $region35: #{_pe_add.1} parent=27 // pred_region
          %179 = dma.done [#allocation6], 128
        $region36: #{_pe_add.1} parent=27 // pred_fallthru
          _
        %s180 = sand.u32 %s42, 1
        %s181 = scalar_lea.sflag [#allocation3], %s180
        %s182 = sand.u32 %s42, 1
        %s183 = smul.addr %s182, 8
        %s184 = scalar_lea.vmem [#allocation2], %s183
        %p185 = pneg %p55
        %p186 = pneg %p52
        %p187 = pneg %p81
        %p188 = pneg %p78
        %p189 = pneg %p109
        %p190 = pneg %p106
        %s191 = sand.u32 %s96, 1
        %s192 = scalar_lea.sflag [#allocation4], %s191
        %s193 = sand.u32 %s96, 1
        %s194 = smul.addr %s193, 8
        %s195 = scalar_lea.vmem [#allocation7], %s194
        %v196 = vld [vmem:[%s171] sm:$0xff]
        %v197 = vld [vmem:[#allocation5] sm:$0xff]
        %v198 = vadd.f32 %v196, %v197
        %vm199 = vcmask 261120
        %200 = vst.msk [vmem:[%s195] sm:$0xff] %vm199, %v198
        %s201 = sand.u32 %s96, 1
        %s202 = scalar_lea.sflag [#allocation4], %s201
        %s203 = sand.u32 %s96, 1
        %s204 = smul.addr %s203, 8
        %s205 = scalar_lea.vmem [#allocation7], %s204
        // Predicated region
        $region37: #{_pe_add.1} parent=27 // pred_check
          %p206 = pneg %p106
        $region38: #{_pe_add.1} parent=27 // pred_check_branch
          %208 = sbr.rel (%p206) target = $region40
        $region39: #{_pe_add.1} parent=27 // pred_region
          %s210 = ssub.s32 128, 128
          %211 = vsyncadd %s202, %s210
          %s212 = sadd.s32 %s24, %s25
          %s213 = smul.addr %s212, 128
          %s214 = scalar_lea.hbm %s2, %s213
          %s216 = sshll.u32 %s205, 4
          %s217 = int_to_ptr.vmem [resolvable:$true] %s216
          %219 = dma.vmem_to_hbm [thread:$0]  %s217, 128, %s214, %s202
        $region40: #{_pe_add.1} parent=27 // pred_fallthru
          _
      $region28: #{_pe_add.1} parent=5 // pred_fallthru
        _
      %p220 = scmp.le.s32.totalorder 2, %s15
      // Predicated region
      $region41: #{_pe_add.1} parent=5 // pred_check
        %p221 = pneg %p220
      $region42: #{_pe_add.1} parent=5 // pred_check_branch
        %223 = sbr.rel (%p221) target = $region44
      $region43: #{_pe_add.1} parent=5 // pred_region
        %s224 = ssub.s32 %s15, 2
        // Predicated region
        $region45: #{_pe_add.1} parent=43 // pred_check
          %p225 = pneg %p112
        $region46: #{_pe_add.1} parent=43 // pred_check_branch
          %227 = sbr.rel (%p225) target = $region48
        $region47: #{_pe_add.1} parent=43 // pred_region
          %s228 = sand.u32 %s97, 1
          %s229 = scalar_lea.sflag [#allocation4], %s228
          %s230 = sand.u32 %s97, 1
          %s231 = smul.addr %s230, 8
          %s232 = scalar_lea.vmem [#allocation7], %s231
          %233 = dma.done %s229, 128
        $region48: #{_pe_add.1} parent=43 // pred_fallthru
          _
      $region44: #{_pe_add.1} parent=5 // pred_fallthru
        _
    $region6: #{_pe_add.1} parent=1 // loop_footer
      %s19 = sadd.s32 1, %s15
    $region7: #{_pe_add.1} parent=1 // loop_footer_branch
      %14 = sbr.rel target = $region3
    $region8: #{_pe_add.1} parent=1 // loop_exit
      _
    %234 = vsyncpa [#allocation3], 1
    %s235 = scalar_lea.sflag [#allocation3], 1
    %236 = vsyncpa %s235, 1
    %237 = vsyncpa [#allocation6], 1
    %238 = vsyncpa [#allocation4], 1
    %s239 = scalar_lea.sflag [#allocation4], 1
    %240 = vsyncpa %s239, 1

</llo_original>
